<compile_context>
chip_gen: v7x
topology: tpu7x:2x2x1
jax: 0.10.0
libtpu: 0.0.40
codegen_flags: <defaults>
</compile_context>

<pallas_src>
import jax
import jax.numpy as jnp
from jax.experimental import pallas as pl
from jax.experimental.pallas import tpu as pltpu


def _puremf_fused_kernel(u_tbl_ref, i_tbl_ref, uid_ref, iid_ref, o_ref):
    """One batch tile.

    u_tbl_ref: (D, NU) bf16 user table (transposed), VMEM-resident across grid.
    i_tbl_ref: (D, NI) bf16 item table (transposed), VMEM-resident across grid.
    uid_ref:   (1, TB) int32 user ids for this tile.
    iid_ref:   (1, TB) int32 item ids for this tile.
    o_ref:     (1, TB) f32 sigmoid(scores) for this tile.
    """
    nu = u_tbl_ref.shape[1]
    ni = i_tbl_ref.shape[1]
    tb = uid_ref.shape[1]

    uid = uid_ref[...]                                           # (1, TB) i32
    iid = iid_ref[...]                                           # (1, TB) i32

    # In-kernel row gather via one-hot matmul on the MXU (exact for 0/1
    # weights with f32 accumulation).  Tables are tiny and live in VMEM.
    # TODO(synk): for tables too large for VMEM, keep them in HBM
    # (memory_space=pl.ANY) and do per-tile DMA gathers instead.
    iota_u = jax.lax.broadcasted_iota(jnp.int32, (nu, tb), 0)
    iota_i = jax.lax.broadcasted_iota(jnp.int32, (ni, tb), 0)
    oh_u = jnp.where(uid == iota_u, 1.0, 0.0).astype(u_tbl_ref.dtype)  # (NU,TB)
    oh_i = jnp.where(iid == iota_i, 1.0, 0.0).astype(i_tbl_ref.dtype)  # (NI,TB)

    gu = jnp.dot(u_tbl_ref[...], oh_u,
                 preferred_element_type=jnp.float32)             # (D, TB) f32
    gi = jnp.dot(i_tbl_ref[...], oh_i,
                 preferred_element_type=jnp.float32)             # (D, TB) f32

    # Reduce over latent dim (sublanes) -> lane-dense (1, TB) scores.
    scores = jnp.sum(gu * gi, axis=0, keepdims=True)

    # Numerically stable sigmoid; exp + approx reciprocal both hit the EUP.
    e = jnp.exp(-jnp.abs(scores))
    r = pl.reciprocal(1.0 + e, approx=True)
    o_ref[...] = jnp.where(scores >= 0.0, r, 1.0 - r)


def puremf_forward(user_tbl_t: jax.Array, item_tbl_t: jax.Array,
                   users: jax.Array, items: jax.Array) -> jax.Array:
    """sigmoid(sum(user_emb[users] * item_emb[items], axis=-1)) -> (B,) f32."""
    d, nu = user_tbl_t.shape
    d2, ni = item_tbl_t.shape
    assert d == d2
    users = users.astype(jnp.int32)   # .long() -> integer index dtype
    items = items.astype(jnp.int32)
    b = users.shape[0]

    # Batch tile: multiple of 128 (unmasked lane-dense output stores), capped
    # at 512 which comfortably fits the scoped VMEM limit on all generations
    # (incl. v7x) with double-buffered index/output tiles.
    tb = 512 if b >= 512 else max(128, ((b + 127) // 128) * 128)
    num_tiles = pl.cdiv(b, tb)
    b_pad = num_tiles * tb

    # Pad ragged batches with index 0 (any valid row); padded rows are sliced
    # off below, so every grid step is an identical full tile.
    uid = jnp.zeros((1, b_pad), jnp.int32).at[0, :b].set(users)
    iid = jnp.zeros((1, b_pad), jnp.int32).at[0, :b].set(items)

    out = pl.pallas_call(
        _puremf_fused_kernel,
        out_shape=jax.ShapeDtypeStruct((1, b_pad), jnp.float32),
        grid_spec=pltpu.PrefetchScalarGridSpec(
            num_scalar_prefetch=0,
            grid=(num_tiles,),
            in_specs=[
                # Tables: constant block index -> stay VMEM-resident.
                pl.BlockSpec((d, nu), lambda i: (0, 0)),
                pl.BlockSpec((d, ni), lambda i: (0, 0)),
                # Per-tile id vectors (batch on the lane axis).
                pl.BlockSpec((1, tb), lambda i: (0, i)),
                pl.BlockSpec((1, tb), lambda i: (0, i)),
            ],
            out_specs=pl.BlockSpec((1, tb), lambda i: (0, i)),
        ),
        compiler_params=pltpu.CompilerParams(
            dimension_semantics=("parallel",)),
    )(user_tbl_t, item_tbl_t, uid, iid)
    return out[0, :b]


class PureMFPallas:
    """Pure matrix-factorization model; embeddings ~ N(0,1) like the module."""

    def __init__(self, n_users: int, m_items: int, latent_dim: int, key):
        ku, ki = jax.random.split(key)
        # torch.nn.Embedding default init is N(0,1).  Tables are stored
        # TRANSPOSED (latent_dim, num_rows) and in bf16: batch lands on the
        # lane axis inside the kernel and HBM/VMEM bytes are halved.
        self.embedding_user_t = jax.random.normal(
            ku, (latent_dim, n_users), dtype=jnp.float32).astype(jnp.bfloat16)
        self.embedding_item_t = jax.random.normal(
            ki, (latent_dim, m_items), dtype=jnp.float32).astype(jnp.bfloat16)

    def forward(self, users: jax.Array, items: jax.Array) -> jax.Array:
        return puremf_forward(self.embedding_user_t, self.embedding_item_t,
                              users, items)


def _reference_forward(model: PureMFPallas, users, items):
    ue = jnp.take(model.embedding_user_t, users, axis=1).astype(jnp.float32)
    ie = jnp.take(model.embedding_item_t, items, axis=1).astype(jnp.float32)
    return jax.nn.sigmoid(jnp.sum(ue * ie, axis=0))


if __name__ == "__main__":
    key = jax.random.PRNGKey(0)
    k_model, k_u1, k_i1, k_u2, k_i2 = jax.random.split(key, 5)

    n_users, m_items, latent_dim = 64, 96, 32
    model = PureMFPallas(n_users, m_items, latent_dim, k_model)

    # Small batch (single padded tile).
    users = jax.random.randint(k_u1, (8,), 0, n_users, dtype=jnp.int32)
    items = jax.random.randint(k_i1, (8,), 0, m_items, dtype=jnp.int32)
    out = jax.block_until_ready(model.forward(users, items))
    ref = _reference_forward(model, users, items)
    assert out.shape == (8,)
    # approx reciprocal (EUP) gives ~1e-4..1e-3 relative error on the sigmoid.
    assert jnp.allclose(out, ref, atol=5e-3, rtol=5e-3), "mismatch vs reference"

    # Ragged multi-tile batch (exercises padding + grid pipelining).
    users2 = jax.random.randint(k_u2, (1000,), 0, n_users, dtype=jnp.int32)
    items2 = jax.random.randint(k_i2, (1000,), 0, m_items, dtype=jnp.int32)
    out2 = jax.block_until_ready(model.forward(users2, items2))
    ref2 = _reference_forward(model, users2, items2)
    assert out2.shape == (1000,)
    assert jnp.allclose(out2, ref2, atol=5e-3, rtol=5e-3), "mismatch vs reference"

    print("KERNEL_OK")
</pallas_src>

<mosaic_0001>
module attributes {stable_mosaic.version = 11 : i64} {
  func.func @_puremf_fused_kernel(%arg0: i32, %arg1: memref<32x64xbf16, #tpu.memory_space<vmem>>, %arg2: memref<32x96xbf16, #tpu.memory_space<vmem>>, %arg3: memref<1x128xi32, #tpu.memory_space<vmem>>, %arg4: memref<1x128xi32, #tpu.memory_space<vmem>>, %arg5: memref<1x128xf32, #tpu.memory_space<vmem>>) attributes {dimension_semantics = [#tpu.dimension_semantics<parallel>], iteration_bounds = array<i64: 1>, scalar_prefetch = 0 : i64, scratch_operands = 0 : i64, tpu.core_type = #tpu.core_type<tc>, window_params = [{pipeline_mode = #tpu.pipeline_mode<synchronous>, transform_indices = @transform_0, window_bounds = array<i64: 32, 64>}, {pipeline_mode = #tpu.pipeline_mode<synchronous>, transform_indices = @transform_1, window_bounds = array<i64: 32, 96>}, {transform_indices = @transform_2, window_bounds = array<i64: 1, 128>}, {transform_indices = @transform_3, window_bounds = array<i64: 1, 128>}, {transform_indices = @transform_4, window_bounds = array<i64: 1, 128>}]} {
    %c0 = arith.constant 0 : index
    %c0_0 = arith.constant 0 : index
    %0 = vector.load %arg3[%c0, %c0_0] : memref<1x128xi32, #tpu.memory_space<vmem>>, vector<1x128xi32>
    %c0_1 = arith.constant 0 : index
    %c0_2 = arith.constant 0 : index
    %1 = vector.load %arg4[%c0_1, %c0_2] : memref<1x128xi32, #tpu.memory_space<vmem>>, vector<1x128xi32>
    %2 = tpu.iota {dimensions = array<i32: 0>} : vector<64x128xi32>
    %3 = tpu.iota {dimensions = array<i32: 0>} : vector<96x128xi32>
    %4 = vector.broadcast %0 : vector<1x128xi32> to vector<64x128xi32>
    %5 = arith.cmpi eq, %4, %2 : vector<64x128xi32>
    %cst = arith.constant 1.000000e+00 : f32
    %cst_3 = arith.constant 0.000000e+00 : f32
    %6 = vector.broadcast %cst : f32 to vector<64x128xf32>
    %7 = vector.broadcast %cst_3 : f32 to vector<64x128xf32>
    %8 = arith.select %5, %6, %7 : vector<64x128xi1>, vector<64x128xf32>
    %9 = arith.truncf %8 : vector<64x128xf32> to vector<64x128xbf16>
    %10 = vector.broadcast %1 : vector<1x128xi32> to vector<96x128xi32>
    %11 = arith.cmpi eq, %10, %3 : vector<96x128xi32>
    %cst_4 = arith.constant 1.000000e+00 : f32
    %cst_5 = arith.constant 0.000000e+00 : f32
    %12 = vector.broadcast %cst_4 : f32 to vector<96x128xf32>
    %13 = vector.broadcast %cst_5 : f32 to vector<96x128xf32>
    %14 = arith.select %11, %12, %13 : vector<96x128xi1>, vector<96x128xf32>
    %15 = arith.truncf %14 : vector<96x128xf32> to vector<96x128xbf16>
    %c0_6 = arith.constant 0 : index
    %c0_7 = arith.constant 0 : index
    %16 = vector.load %arg1[%c0_6, %c0_7] : memref<32x64xbf16, #tpu.memory_space<vmem>>, vector<32x64xbf16>
    %cst_8 = arith.constant dense<0.000000e+00> : vector<32x128xf32>
    %17 = tpu.matmul %16, %9, %cst_8 {dimension_numbers = #tpu.dot_dimension_numbers<[1], [0], [0], [1], [0, 0, 1, 1], [], []>} : vector<32x64xbf16>, vector<64x128xbf16>, vector<32x128xf32> -> vector<32x128xf32>
    %c0_9 = arith.constant 0 : index
    %c0_10 = arith.constant 0 : index
    %18 = vector.load %arg2[%c0_9, %c0_10] : memref<32x96xbf16, #tpu.memory_space<vmem>>, vector<32x96xbf16>
    %cst_11 = arith.constant dense<0.000000e+00> : vector<32x128xf32>
    %19 = tpu.matmul %18, %15, %cst_11 {dimension_numbers = #tpu.dot_dimension_numbers<[1], [0], [0], [1], [0, 0, 1, 1], [], []>} : vector<32x96xbf16>, vector<96x128xbf16>, vector<32x128xf32> -> vector<32x128xf32>
    %20 = arith.mulf %17, %19 : vector<32x128xf32>
    %cst_12 = arith.constant dense<0.000000e+00> : vector<128xf32>
    %21 = vector.multi_reduction <add>, %20, %cst_12 [0] : vector<32x128xf32> to vector<128xf32>
    %22 = vector.shape_cast %21 : vector<128xf32> to vector<1x128xf32>
    %23 = math.absf %22 : vector<1x128xf32>
    %cst_13 = arith.constant 0.000000e+00 : f32
    %24 = vector.broadcast %cst_13 : f32 to vector<1x128xf32>
    %25 = arith.subf %24, %23 : vector<1x128xf32>
    %26 = math.exp %25 : vector<1x128xf32>
    %cst_14 = arith.constant 1.000000e+00 : f32
    %27 = vector.broadcast %cst_14 : f32 to vector<1x128xf32>
    %28 = arith.addf %27, %26 : vector<1x128xf32>
    %29 = tpu.reciprocal %28 {approx = true} : vector<1x128xf32> -> vector<1x128xf32>
    %cst_15 = arith.constant 0.000000e+00 : f32
    %30 = vector.broadcast %cst_15 : f32 to vector<1x128xf32>
    %31 = arith.cmpf oge, %22, %30 : vector<1x128xf32>
    %cst_16 = arith.constant 1.000000e+00 : f32
    %32 = vector.broadcast %cst_16 : f32 to vector<1x128xf32>
    %33 = arith.subf %32, %29 : vector<1x128xf32>
    %34 = arith.select %31, %29, %33 : vector<1x128xi1>, vector<1x128xf32>
    %c0_17 = arith.constant 0 : index
    %c0_18 = arith.constant 0 : index
    %35 = vector.load %arg5[%c0_17, %c0_18] : memref<1x128xf32, #tpu.memory_space<vmem>>, vector<1x128xf32>
    tpu.vector_store %arg5[%c0_17, %c0_18], %34 {strides = array<i32>} : memref<1x128xf32, #tpu.memory_space<vmem>>, vector<1x128xf32>,
    return
  }
  func.func @transform_0(%arg0: i32) -> (i32, i32) {
    %c0_i32 = arith.constant 0 : i32
    %c0_i32_0 = arith.constant 0 : i32
    %c0_i32_1 = arith.constant 0 : i32
    return %c0_i32, %c0_i32_0 : i32, i32
  }
  func.func @transform_1(%arg0: i32) -> (i32, i32) {
    %c0_i32 = arith.constant 0 : i32
    %c0_i32_0 = arith.constant 0 : i32
    %c0_i32_1 = arith.constant 0 : i32
    return %c0_i32, %c0_i32_0 : i32, i32
  }
  func.func @transform_2(%arg0: i32) -> (i32, i32) {
    %c0_i32 = arith.constant 0 : i32
    %c0_i32_0 = arith.constant 0 : i32
    return %c0_i32, %arg0 : i32, i32
  }
  func.func @transform_3(%arg0: i32) -> (i32, i32) {
    %c0_i32 = arith.constant 0 : i32
    %c0_i32_0 = arith.constant 0 : i32
    return %c0_i32, %arg0 : i32, i32
  }
  func.func @transform_4(%arg0: i32) -> (i32, i32) {
    %c0_i32 = arith.constant 0 : i32
    %c0_i32_0 = arith.constant 0 : i32
    return %c0_i32, %arg0 : i32, i32
  }
}

</mosaic_0001>

<llo_original>
// kernel: tpu_custom_call.1
$region0: #{tpu_custom_call.1}
  #allocation0 [shape = 'u32[]', space=smem, size = 0x4, offset = 0x4, fixed_abs, tag = 'smem constant byte address 0x4 - core index']
  #allocation1 [shape = 'u32[144,128]{1,0:T(1,128)}', space=vmem, size = 0x12000, scoped, tag = 'internal scratch']
  %s0 = inlined_call_operand.hbm [shape: bf16[32,64], index: 0, kind: input, shape index: {}]
  %s1 = inlined_call_operand.hbm [shape: bf16[32,96], index: 1, kind: input, shape index: {}]
  %s2 = inlined_call_operand.vmem [shape: s32[1,128], index: 2, kind: input, shape index: {}]
  %s3 = inlined_call_operand.vmem [shape: s32[1,128], index: 3, kind: input, shape index: {}]
  %s4 = inlined_call_operand.hbm [shape: f32[1,128], index: 4, kind: output, shape index: {}]
  %s5 = sld [smem:[#allocation0]]
  $region34: #{tpu_custom_call.1} parent=0
    _
  %s7 = ssub.s32 1, %s5
  %s8 = scalar_select 0, %s7, %s5
  $region1: #{tpu_custom_call.1} parent=0
    #allocation2 [shape = 'u8[8192]{0}', space=vmem, size = 0x2000, scoped, tag = 'input window, operand 0, single buffered']
    #allocation3 [shape = 's32[1]{0}', space=sflag, size = 0x4, scoped, tag = 'scoped memory for tpu_custom_call.1']
    #allocation4 [shape = 's32[1]{0}', space=sflag, size = 0x4, scoped, tag = 'scoped memory for tpu_custom_call.1']
    #allocation5 [shape = 'u8[8192]{0}', space=vmem, size = 0x2000, scoped, tag = 'input window, operand 1, single buffered']
    #allocation6 [shape = 's32[1]{0}', space=sflag, size = 0x4, scoped, tag = 'scoped memory for tpu_custom_call.1']
    #allocation7 [shape = 'u8[512]{0}', space=vmem, size = 0x400, scoped, tag = 'output window, operand 0, single buffered']
    %9 = vsyncpa [#allocation3], 0
    %10 = vsyncpa [#allocation6], 0
    %11 = vsyncpa [#allocation4], 0
    // Predicated region
    $region2: #{tpu_custom_call.1} parent=1 // pred_check
      _
    $region3: #{tpu_custom_call.1} parent=1 // pred_check_branch
      %13 = sbr.rel (0) target = $region5
    $region4: #{tpu_custom_call.1} parent=1 // pred_region
      %s15 = ssub.s32 256, 256
      %16 = vsyncadd [#allocation3], %s15
      %s17 = sshll.u32 [#allocation2], 4
      %s18 = int_to_ptr.vmem [resolvable:$true] %s17
      %23 = dma.hbm_to_vmem [thread:$0]  %s0, 256, %s18, [#allocation3], 64, 64, 4
    $region5: #{tpu_custom_call.1} parent=1 // pred_fallthru
      _
    // Predicated region
    $region6: #{tpu_custom_call.1} parent=1 // pred_check
      _
    $region7: #{tpu_custom_call.1} parent=1 // pred_check_branch
      %25 = sbr.rel (0) target = $region9
    $region8: #{tpu_custom_call.1} parent=1 // pred_region
      %s27 = ssub.s32 256, 256
      %28 = vsyncadd [#allocation6], %s27
      %s29 = sshll.u32 [#allocation5], 4
      %s30 = int_to_ptr.vmem [resolvable:$true] %s29
      %35 = dma.hbm_to_vmem [thread:$0]  %s1, 256, %s30, [#allocation6], 64, 64, 4
    $region9: #{tpu_custom_call.1} parent=1 // pred_fallthru
      _
    // Predicated region
    $region10: #{tpu_custom_call.1} parent=1 // pred_check
      _
    $region11: #{tpu_custom_call.1} parent=1 // pred_check_branch
      %37 = sbr.rel (0) target = $region13
    $region12: #{tpu_custom_call.1} parent=1 // pred_region
      _
    $region13: #{tpu_custom_call.1} parent=1 // pred_fallthru
      _
    // Predicated region
    $region14: #{tpu_custom_call.1} parent=1 // pred_check
      _
    $region15: #{tpu_custom_call.1} parent=1 // pred_check_branch
      %39 = sbr.rel (0) target = $region17
    $region16: #{tpu_custom_call.1} parent=1 // pred_region
      _
    $region17: #{tpu_custom_call.1} parent=1 // pred_fallthru
      _
    // Predicated region
    $region18: #{tpu_custom_call.1} parent=1 // pred_check
      _
    $region19: #{tpu_custom_call.1} parent=1 // pred_check_branch
      %41 = sbr.rel (0) target = $region21
    $region20: #{tpu_custom_call.1} parent=1 // pred_region
      %42 = dma.done [#allocation3], 256
    $region21: #{tpu_custom_call.1} parent=1 // pred_fallthru
      _
    // Predicated region
    $region22: #{tpu_custom_call.1} parent=1 // pred_check
      _
    $region23: #{tpu_custom_call.1} parent=1 // pred_check_branch
      %44 = sbr.rel (0) target = $region25
    $region24: #{tpu_custom_call.1} parent=1 // pred_region
      %45 = dma.done [#allocation6], 256
    $region25: #{tpu_custom_call.1} parent=1 // pred_fallthru
      _
    %v47 = vld [vmem:[%s2] sm:$0x1]
    %v48 = vld [vmem:[%s3] sm:$0x1]
    %v49 = vlaneseq
    %v50 = vshrl.u32 %v49, 7
    %v51 = vadd.s32 %v50, 8
    %v52 = vadd.s32 %v50, 16
    %v53 = vadd.s32 %v50, 24
    %v54 = vadd.s32 %v50, 32
    %v55 = vadd.s32 %v50, 40
    %v56 = vadd.s32 %v50, 48
    %v57 = vadd.s32 %v50, 56
    %v58 = vadd.s32 %v50, 64
    %v59 = vadd.s32 %v50, 72
    %v60 = vadd.s32 %v50, 80
    %v61 = vadd.s32 %v50, 88
    %v62 = vlaneseq
    %v63 = vshrl.u32 %v62, 7
    %v64 = vsub.s32 0, %v63
    %v65 = vrot.slane %v47, %v64
    %vm66 = vcmp.eq.s32.totalorder %v65, %v50
    %vm67 = vcmp.eq.s32.totalorder %v65, %v51
    %vm68 = vcmp.eq.s32.totalorder %v65, %v52
    %vm69 = vcmp.eq.s32.totalorder %v65, %v53
    %vm70 = vcmp.eq.s32.totalorder %v65, %v54
    %vm71 = vcmp.eq.s32.totalorder %v65, %v55
    %vm72 = vcmp.eq.s32.totalorder %v65, %v56
    %vm73 = vcmp.eq.s32.totalorder %v65, %v57
    %v74 = vsel %vm66, 1.0, 0.0
    %v75 = vsel %vm67, 1.0, 0.0
    %v76 = vsel %vm68, 1.0, 0.0
    %v77 = vsel %vm69, 1.0, 0.0
    %v78 = vsel %vm70, 1.0, 0.0
    %v79 = vsel %vm71, 1.0, 0.0
    %v80 = vsel %vm72, 1.0, 0.0
    %v81 = vsel %vm73, 1.0, 0.0
    %v82 = vpack.c.bf16 %v75, %v74
    %v83 = vpack.c.bf16 %v77, %v76
    %v84 = vpack.c.bf16 %v79, %v78
    %v85 = vpack.c.bf16 %v81, %v80
    %v86 = vlaneseq
    %v87 = vshrl.u32 %v86, 7
    %v88 = vsub.s32 0, %v87
    %v89 = vrot.slane %v48, %v88
    %vm90 = vcmp.eq.s32.totalorder %v89, %v50
    %vm91 = vcmp.eq.s32.totalorder %v89, %v51
    %vm92 = vcmp.eq.s32.totalorder %v89, %v52
    %vm93 = vcmp.eq.s32.totalorder %v89, %v53
    %vm94 = vcmp.eq.s32.totalorder %v89, %v54
    %vm95 = vcmp.eq.s32.totalorder %v89, %v55
    %vm96 = vcmp.eq.s32.totalorder %v89, %v56
    %vm97 = vcmp.eq.s32.totalorder %v89, %v57
    %vm98 = vcmp.eq.s32.totalorder %v89, %v58
    %vm99 = vcmp.eq.s32.totalorder %v89, %v59
    %vm100 = vcmp.eq.s32.totalorder %v89, %v60
    %vm101 = vcmp.eq.s32.totalorder %v89, %v61
    %v102 = vsel %vm90, 1.0, 0.0
    %v103 = vsel %vm91, 1.0, 0.0
    %v104 = vsel %vm92, 1.0, 0.0
    %v105 = vsel %vm93, 1.0, 0.0
    %v106 = vsel %vm94, 1.0, 0.0
    %v107 = vsel %vm95, 1.0, 0.0
    %v108 = vsel %vm96, 1.0, 0.0
    %v109 = vsel %vm97, 1.0, 0.0
    %v110 = vsel %vm98, 1.0, 0.0
    %v111 = vsel %vm99, 1.0, 0.0
    %v112 = vsel %vm100, 1.0, 0.0
    %v113 = vsel %vm101, 1.0, 0.0
    %v114 = vpack.c.bf16 %v103, %v102
    %v115 = vpack.c.bf16 %v105, %v104
    %v116 = vpack.c.bf16 %v107, %v106
    %v117 = vpack.c.bf16 %v109, %v108
    %v118 = vpack.c.bf16 %v111, %v110
    %v119 = vpack.c.bf16 %v113, %v112
    %v120 = vld [vmem:[#allocation2] sm:$0xf]
    %v121 = vld [vmem:[#allocation2 + $0x4] sm:$0xf]
    %v122 = vld [vmem:[#allocation2 + $0x8] sm:$0xf]
    %v123 = vld [vmem:[#allocation2 + $0xc] sm:$0xf]
    %v128 = vunpack.c.l.b16 %v120
    %v129 = vunpack.c.l.b16 %v121
    %v130 = vunpack.c.l.b16 %v122
    %v131 = vunpack.c.l.b16 %v123
    %v132 = vpack.c.b16 %v129, %v128
    %v133 = vpack.c.b16 %v131, %v130
    %vm134 = vcmask 523264
    %v136 = vsel %vm134, %v132, 0
    %v139 = vsel %vm134, %v133, 0
    %141 = vmatprep.subr.bf16.mxu0 0
    %142 = vmatpush1.bf16.msra.mxu0 %v82
    %143 = vmatprep.subr.bf16.mxu0 0
    %144 = vmatpush1.bf16.msra.mxu0 %v83
    %145 = vmatprep.subr.bf16.mxu0 0
    %146 = vmatpush1.bf16.msra.mxu0 %v84
    %147 = vmatprep.subr.bf16.mxu0 0
    %148 = vmatpush1.bf16.msra.mxu0 %v85
    %149 = vmatprep.subr.bf16.mxu0 0
    %150 = vmatpush1.bf16.msra.mxu0 0
    %151 = vmatprep.subr.bf16.mxu0 0
    %152 = vmatpush1.bf16.msra.mxu0 0
    %153 = vmatprep.subr.bf16.mxu0 0
    %154 = vmatpush1.bf16.msra.mxu0 0
    %155 = vmatprep.subr.bf16.mxu0 0
    %156 = vmatpush1.bf16.msra.mxu0 0
    %157 = vmatprep.subr.bf16.mxu0 0
    %158 = vmatpush1.bf16.msra.mxu0 0
    %159 = vmatprep.subr.bf16.mxu0 0
    %160 = vmatpush1.bf16.msra.mxu0 0
    %161 = vmatprep.subr.bf16.mxu0 0
    %162 = vmatpush1.bf16.msra.mxu0 0
    %163 = vmatprep.subr.bf16.mxu0 0
    %164 = vmatpush1.bf16.msra.mxu0 0
    %165 = vmatprep.subr.bf16.mxu0 0
    %166 = vmatpush1.bf16.msra.mxu0 0
    %167 = vmatprep.subr.bf16.mxu0 0
    %168 = vmatpush1.bf16.msra.mxu0 0
    %169 = vmatprep.subr.bf16.mxu0 0
    %170 = vmatpush1.bf16.msra.mxu0 0
    %171 = vmatprep.subr.bf16.mxu0 0
    %172 = vmatpush1.bf16.msra.mxu0 0
    %173 = vmatprep.mubr.bf16.mxu0 0
    %174 = vmatmul.mubr.bf16.gmra.mrb[0].mxu0 %v136
    %v175 = vpop.f32.mrb[0].mxu0
    %v176 = vadd.f32 0.0, %v175
    %v177 = vpop.f32.mrb[0].mxu0
    %v178 = vpop.f32.mrb[0].mxu0
    %v179 = vadd.f32 0.0, %v178
    %v180 = vpop.f32.mrb[0].mxu0
    %181 = vmatprep.mubr.bf16.mxu0 0
    %182 = vmatmul.mubr.bf16.gmra.mrb[0].mxu0 %v139
    %v183 = vpop.f32.mrb[0].mxu0
    %v184 = vadd.f32 0.0, %v183
    %v185 = vpop.f32.mrb[0].mxu0
    %v186 = vpop.f32.mrb[0].mxu0
    %v187 = vadd.f32 0.0, %v186
    %v188 = vpop.f32.mrb[0].mxu0
    %189 = vdwg.mxu0
    %v190 = vld [vmem:[#allocation5] sm:$0xf]
    %v191 = vld [vmem:[#allocation5 + $0x4] sm:$0xf]
    %v192 = vld [vmem:[#allocation5 + $0x8] sm:$0xf]
    %v193 = vld [vmem:[#allocation5 + $0xc] sm:$0xf]
    %v198 = vunpack.c.l.b16 %v190
    %v199 = vunpack.c.l.b16 %v191
    %v200 = vunpack.c.l.b16 %v192
    %v201 = vunpack.c.l.b16 %v193
    %v202 = vpack.c.b16 %v199, %v198
    %v203 = vpack.c.b16 %v201, %v200
    %vm204 = vcmask 785408
    %v206 = vsel %vm204, %v202, 0
    %v209 = vsel %vm204, %v203, 0
    %211 = vmatprep.subr.bf16.mxu0 0
    %212 = vmatpush1.bf16.msra.mxu0 %v114
    %213 = vmatprep.subr.bf16.mxu0 0
    %214 = vmatpush1.bf16.msra.mxu0 %v115
    %215 = vmatprep.subr.bf16.mxu0 0
    %216 = vmatpush1.bf16.msra.mxu0 %v116
    %217 = vmatprep.subr.bf16.mxu0 0
    %218 = vmatpush1.bf16.msra.mxu0 %v117
    %219 = vmatprep.subr.bf16.mxu0 0
    %220 = vmatpush1.bf16.msra.mxu0 %v118
    %221 = vmatprep.subr.bf16.mxu0 0
    %222 = vmatpush1.bf16.msra.mxu0 %v119
    %223 = vmatprep.subr.bf16.mxu0 0
    %224 = vmatpush1.bf16.msra.mxu0 0
    %225 = vmatprep.subr.bf16.mxu0 0
    %226 = vmatpush1.bf16.msra.mxu0 0
    %227 = vmatprep.subr.bf16.mxu0 0
    %228 = vmatpush1.bf16.msra.mxu0 0
    %229 = vmatprep.subr.bf16.mxu0 0
    %230 = vmatpush1.bf16.msra.mxu0 0
    %231 = vmatprep.subr.bf16.mxu0 0
    %232 = vmatpush1.bf16.msra.mxu0 0
    %233 = vmatprep.subr.bf16.mxu0 0
    %234 = vmatpush1.bf16.msra.mxu0 0
    %235 = vmatprep.subr.bf16.mxu0 0
    %236 = vmatpush1.bf16.msra.mxu0 0
    %237 = vmatprep.subr.bf16.mxu0 0
    %238 = vmatpush1.bf16.msra.mxu0 0
    %239 = vmatprep.subr.bf16.mxu0 0
    %240 = vmatpush1.bf16.msra.mxu0 0
    %241 = vmatprep.subr.bf16.mxu0 0
    %242 = vmatpush1.bf16.msra.mxu0 0
    %243 = vmatprep.mubr.bf16.mxu0 0
    %244 = vmatmul.mubr.bf16.gmra.mrb[0].mxu0 %v206
    %v245 = vpop.f32.mrb[0].mxu0
    %v246 = vadd.f32 0.0, %v245
    %v247 = vpop.f32.mrb[0].mxu0
    %v248 = vpop.f32.mrb[0].mxu0
    %v249 = vadd.f32 0.0, %v248
    %v250 = vpop.f32.mrb[0].mxu0
    %251 = vmatprep.mubr.bf16.mxu0 0
    %252 = vmatmul.mubr.bf16.gmra.mrb[0].mxu0 %v209
    %v253 = vpop.f32.mrb[0].mxu0
    %v254 = vadd.f32 0.0, %v253
    %v255 = vpop.f32.mrb[0].mxu0
    %v256 = vpop.f32.mrb[0].mxu0
    %v257 = vadd.f32 0.0, %v256
    %v258 = vpop.f32.mrb[0].mxu0
    %259 = vdwg.mxu0
    %v260 = vmul.f32 %v176, %v246
    %v261 = vmul.f32 %v179, %v249
    %v262 = vmul.f32 %v184, %v254
    %v263 = vmul.f32 %v187, %v257
    %v264 = vadd.f32 %v260, %v261
    %v265 = vadd.f32 %v264, %v262
    %v266 = vadd.f32 %v265, %v263
    %v267 = vrot.slane %v266, 4
    %v268 = vadd.f32 %v266, %v267
    %v269 = vrot.slane %v268, 2
    %v270 = vadd.f32 %v268, %v269
    %v271 = vrot.slane %v270, 1
    %v272 = vadd.f32 %v270, %v271
    %v273 = vand.u32 2147483647, %v272
    %v274 = vsub.f32 0.0, %v273
    %v275 = vmul.f32 %v274, 1.442695
    %v276 = vpow.pop %v275
    %v277 = vadd.f32 %v276, 1.0
    %v278 = vrcp.pop %v277
    %vm279 = vcmp.ge.f32.partialorder %v272, 0.0
    %v280 = vsub.f32 1.0, %v278
    %v281 = vsel %vm279, %v278, %v280
    %282 = vst [vmem:[#allocation7] sm:$0x1] %v281
    // Predicated region
    $region26: #{tpu_custom_call.1} parent=1 // pred_check
      _
    $region27: #{tpu_custom_call.1} parent=1 // pred_check_branch
      %284 = sbr.rel (0) target = $region29
    $region28: #{tpu_custom_call.1} parent=1 // pred_region
      %s286 = ssub.s32 16, 16
      %287 = vsyncadd [#allocation4], %s286
      %s289 = sshll.u32 [#allocation7], 4
      %s290 = int_to_ptr.vmem [resolvable:$true] %s289
      %292 = dma.vmem_to_hbm [thread:$0]  %s290, 16, %s4, [#allocation4]
    $region29: #{tpu_custom_call.1} parent=1 // pred_fallthru
      _
    // Predicated region
    $region30: #{tpu_custom_call.1} parent=1 // pred_check
      _
    $region31: #{tpu_custom_call.1} parent=1 // pred_check_branch
      %294 = sbr.rel (0) target = $region33
    $region32: #{tpu_custom_call.1} parent=1 // pred_region
      %295 = dma.done [#allocation4], 16
    $region33: #{tpu_custom_call.1} parent=1 // pred_fallthru
      _
    %296 = vsyncpa [#allocation3], 1
    %297 = vsyncpa [#allocation6], 1
    %298 = vsyncpa [#allocation4], 1

</llo_original>
